<compile_context>
chip_gen: v7x
topology: tpu7x:2x2x1
jax: 0.10.0
libtpu: 0.0.40
codegen_flags: <defaults>
</compile_context>

<pallas_src>
import jax
import jax.numpy as jnp
from jax import lax
from jax.experimental import pallas as pl
from jax.experimental.pallas import tpu as pltpu


def _attention_pooling_kernel(h_ref, w_ref, o_ref):
    """One grid step processes a tile of TB batch elements.

    h_ref : (TB, N_in, H)       node-feature tile (VMEM, compute dtype)
    w_ref : (H, N_out)          attention projection weight (compute dtype)
    o_ref : (TB, N_out * H)     pooled output tile, lane-dense (f32)
    """
    tb, n_in, hidden = h_ref.shape
    nodes_out = w_ref.shape[1]

    h3 = h_ref[...]                                         # (TB, N_in, H)
    # Flatten the batch tile -> ONE MXU matmul for the scores of every batch
    # element in the tile.  Layout no-op as long as N_in is a multiple of the
    # sublane packing (8 for f32, 16 for bf16).
    h2 = h3.reshape(tb * n_in, hidden)                      # (TB*N_in, H)
    scores = jnp.dot(h2, w_ref[...],
                     preferred_element_type=jnp.float32)    # (TB*N_in, N_out)
    scores = scores.reshape(tb, n_in, nodes_out)            # (TB, N_in, N_out)

    # Softmax over the input-node axis (axis=1), batched over the whole tile,
    # in f32.  NOTE: the module's bias b_attn is folded out -- a constant per
    # N_out column cannot change a softmax taken over N_in.
    m = jnp.max(scores, axis=1, keepdims=True)              # (TB, 1, N_out)
    e = jnp.exp(scores - m)                                 # (TB, N_in, N_out)
    denom = jnp.sum(e, axis=1, keepdims=True)               # (TB, 1, N_out)
    # Exact reciprocal: approx=True's ~1e-3 relative error broke correctness,
    # and only TB*N_out reciprocals are needed per step.
    attn = e * pl.reciprocal(denom, approx=False)           # (TB, N_in, N_out)

    # pooled[b, o, h] = sum_n attn[b, n, o] * h[b, n, h]
    # One batched dot_general contracting N_in directly (no explicit .T).
    pooled = lax.dot_general(
        attn.astype(h3.dtype), h3,
        dimension_numbers=(((1,), (1,)), ((0,), (0,))),
        preferred_element_type=jnp.float32)                 # (TB, N_out, H)

    # Lane-dense store: one (TB, N_out*H) slab per grid step.
    o_ref[...] = pooled.reshape(tb, nodes_out * hidden).astype(o_ref.dtype)


def _vmem_budgets():
    """Returns (tile_budget_bytes, scoped_vmem_limit_bytes) per generation."""
    try:
        cap = int(pltpu.get_tpu_info().vmem_capacity_bytes)
        if not cap:
            cap = 64 << 20
    except Exception:
        cap = 64 << 20          # assume the smallest (v7x: 64 MiB per TC)
    # ~half of physical VMEM for the pipelined tiles, 3/4 as the scoped limit:
    #   v7x      -> 32 MiB tiles / 48 MiB limit
    #   v5e/v6e  -> 64 MiB tiles / 96 MiB limit
    return cap // 2, (cap * 3) // 4


def _pick_batch_tile(batch, n_in, nodes_out, hidden, h_itemsize, out_itemsize,
                     tile_budget_bytes):
    """Pick TB so the double-buffered input+output slabs fill the VMEM budget."""
    per_b = (2 * n_in * hidden * h_itemsize
             + 2 * nodes_out * hidden * out_itemsize)
    tb = max(1, int(tile_budget_bytes // per_b))
    if tb >= batch:
        # Whole batch fits in one tile.  Still keep >= 2 grid steps when cheap
        # so the "parallel" batch axis shards across v7x's two TensorCores.
        half = batch // 2
        if batch >= 16 and half % 8 == 0:
            return half
        return batch
    # Sublane-align the output block's second-to-last dim (f32 packing = 8).
    return min(batch, max(8, (tb // 8) * 8))


def attention_pooling(h, w_attn, b_attn, nodes_out, *,
                      compute_dtype=None, out_dtype=jnp.float32,
                      batch_tile=None):
    """h: (B, N_in, H); w_attn: (H, N_out); b_attn: (N_out,).

    b_attn is accepted for interface parity with the PyTorch module but folded
    out of the kernel (softmax over N_in is invariant to a constant per N_out
    column, so it cannot affect the pooled output).
    Returns (B, N_out, H) in `out_dtype`.
    """
    del b_attn  # mathematically a no-op for the output; see docstring
    B, n_in, hidden = h.shape

    if compute_dtype is not None:
        # Cast in the wrapper so HBM traffic shrinks too (memory-bound kernel).
        h = h.astype(compute_dtype)
        w_attn = w_attn.astype(compute_dtype)

    tile_budget, vmem_limit = _vmem_budgets()
    if batch_tile is None:
        tb = _pick_batch_tile(B, n_in, nodes_out, hidden,
                              h.dtype.itemsize, jnp.dtype(out_dtype).itemsize,
                              tile_budget)
    else:
        tb = min(int(batch_tile), B)

    # No host-side padding concat: ragged-tail OOB output rows are discarded
    # by Pallas; batch elements are independent so garbage tail rows cannot
    # contaminate valid outputs.
    grid = (pl.cdiv(B, tb),)

    out_itemsize = jnp.dtype(out_dtype).itemsize
    cost = pl.CostEstimate(
        flops=4 * B * n_in * nodes_out * hidden,
        transcendentals=B * n_in * nodes_out + B * nodes_out,
        bytes_accessed=(h.dtype.itemsize * (B * n_in * hidden
                                            + hidden * nodes_out)
                        + out_itemsize * B * nodes_out * hidden),
    )

    out = pl.pallas_call(
        _attention_pooling_kernel,
        out_shape=jax.ShapeDtypeStruct((B, nodes_out * hidden), out_dtype),
        grid_spec=pl.GridSpec(
            grid=grid,
            in_specs=[
                pl.BlockSpec((tb, n_in, hidden), lambda i: (i, 0, 0)),
                pl.BlockSpec((hidden, nodes_out), lambda i: (0, 0)),
            ],
            # Lane-dense output slab: last dim N_out*H (multiple of 128 at
            # realistic shapes) -> unmasked vector stores.
            out_specs=pl.BlockSpec((tb, nodes_out * hidden), lambda i: (i, 0)),
        ),
        compiler_params=pltpu.CompilerParams(
            dimension_semantics=("parallel",),
            vmem_limit_bytes=int(vmem_limit),
        ),
        cost_estimate=cost,
    )(h, w_attn)
    return out.reshape(B, nodes_out, hidden)


def attention_pooling_ref(h, w_attn, b_attn):
    scores = jnp.einsum("bnh,ho->bno", h, w_attn) + b_attn  # (B, N_in, N_out)
    attn = jax.nn.softmax(scores, axis=1)                   # over N_in
    return jnp.einsum("bno,bnh->boh", attn, h)              # (B, N_out, H)


if __name__ == "__main__":
    key = jax.random.PRNGKey(0)
    B, nodes_in, nodes_out, hidden = 2, 16, 8, 32

    k_h, k_w, k_b = jax.random.split(key, 3)
    h = jax.random.normal(k_h, (B, nodes_in, hidden), dtype=jnp.float32)
    # deterministic parameter init (Linear(hidden -> nodes_out))
    w_attn = jax.random.normal(k_w, (hidden, nodes_out), dtype=jnp.float32) * 0.1
    b_attn = jax.random.normal(k_b, (nodes_out,), dtype=jnp.float32) * 0.1

    ref = attention_pooling_ref(h, w_attn, b_attn)

    # f32 path (exact reciprocal; tolerance also covers possible multi-pass
    # MXU f32 matmul rounding on hardware).
    out = attention_pooling(h, w_attn, b_attn, nodes_out)
    out = jax.block_until_ready(out)
    assert out.shape == (B, nodes_out, hidden), out.shape
    assert jnp.allclose(out, ref, atol=5e-3, rtol=5e-3), float(
        jnp.max(jnp.abs(out - ref)))

    # bf16 streaming path: halves HBM traffic / VMEM per tile; softmax and
    # accumulation stay f32.  Looser tolerance for bf16 inputs.
    out_bf16 = attention_pooling(h, w_attn, b_attn, nodes_out,
                                 compute_dtype=jnp.bfloat16)
    out_bf16 = jax.block_until_ready(out_bf16)
    assert out_bf16.shape == (B, nodes_out, hidden), out_bf16.shape
    assert jnp.allclose(out_bf16, ref, atol=1e-1, rtol=1e-1), float(
        jnp.max(jnp.abs(out_bf16 - ref)))

    print("KERNEL_OK")
</pallas_src>

<mosaic_0001>
module attributes {stable_mosaic.version = 11 : i64} {
  func.func @_attention_pooling_kernel(%arg0: i32, %arg1: memref<2x16x32xf32, #tpu.memory_space<vmem>>, %arg2: memref<32x8xf32, #tpu.memory_space<vmem>>, %arg3: memref<2x256xf32, #tpu.memory_space<vmem>>) attributes {dimension_semantics = [#tpu.dimension_semantics<parallel>], iteration_bounds = array<i64: 1>, scalar_prefetch = 0 : i64, scratch_operands = 0 : i64, tpu.core_type = #tpu.core_type<tc>, window_params = [{transform_indices = @transform_0, window_bounds = array<i64: 2, 16, 32>}, {pipeline_mode = #tpu.pipeline_mode<synchronous>, transform_indices = @transform_1, window_bounds = array<i64: 32, 8>}, {transform_indices = @transform_2, window_bounds = array<i64: 2, 256>}]} {
    %c0 = arith.constant 0 : index
    %c0_0 = arith.constant 0 : index
    %c0_1 = arith.constant 0 : index
    %0 = vector.load %arg1[%c0, %c0_0, %c0_1] : memref<2x16x32xf32, #tpu.memory_space<vmem>>, vector<2x16x32xf32>
    %1 = vector.shape_cast %0 : vector<2x16x32xf32> to vector<32x32xf32>
    %c0_2 = arith.constant 0 : index
    %c0_3 = arith.constant 0 : index
    %2 = vector.load %arg2[%c0_2, %c0_3] : memref<32x8xf32, #tpu.memory_space<vmem>>, vector<32x8xf32>
    %cst = arith.constant dense<0.000000e+00> : vector<32x8xf32>
    %3 = tpu.matmul %1, %2, %cst {dimension_numbers = #tpu.dot_dimension_numbers<[1], [0], [0], [1], [0, 0, 1, 1], [], []>} : vector<32x32xf32>, vector<32x8xf32>, vector<32x8xf32> -> vector<32x8xf32>
    %4 = vector.shape_cast %3 : vector<32x8xf32> to vector<2x16x8xf32>
    %cst_4 = arith.constant dense<0xFF800000> : vector<2x8xf32>
    %5 = vector.multi_reduction <maximumf>, %4, %cst_4 [1] : vector<2x16x8xf32> to vector<2x8xf32>
    %6 = vector.shape_cast %5 : vector<2x8xf32> to vector<2x1x8xf32>
    %7 = vector.broadcast %6 : vector<2x1x8xf32> to vector<2x16x8xf32>
    %8 = arith.subf %4, %7 : vector<2x16x8xf32>
    %9 = math.exp %8 : vector<2x16x8xf32>
    %cst_5 = arith.constant dense<0.000000e+00> : vector<2x8xf32>
    %10 = vector.multi_reduction <add>, %9, %cst_5 [1] : vector<2x16x8xf32> to vector<2x8xf32>
    %11 = vector.shape_cast %10 : vector<2x8xf32> to vector<2x1x8xf32>
    %12 = tpu.reciprocal %11 : vector<2x1x8xf32> -> vector<2x1x8xf32>
    %13 = vector.broadcast %12 : vector<2x1x8xf32> to vector<2x16x8xf32>
    %14 = arith.mulf %9, %13 : vector<2x16x8xf32>
    %cst_6 = arith.constant dense<0.000000e+00> : vector<2x8x32xf32>
    %15 = tpu.matmul %14, %0, %cst_6 {dimension_numbers = #tpu.dot_dimension_numbers<[1], [1], [2], [2], [0, 0, 0, 2, 1, 2], [0], [0]>} : vector<2x16x8xf32>, vector<2x16x32xf32>, vector<2x8x32xf32> -> vector<2x8x32xf32>
    %16 = vector.shape_cast %15 : vector<2x8x32xf32> to vector<2x256xf32>
    %c0_7 = arith.constant 0 : index
    %c0_8 = arith.constant 0 : index
    %17 = vector.load %arg3[%c0_7, %c0_8] : memref<2x256xf32, #tpu.memory_space<vmem>>, vector<2x256xf32>
    tpu.vector_store %arg3[%c0_7, %c0_8], %16 {strides = array<i32>} : memref<2x256xf32, #tpu.memory_space<vmem>>, vector<2x256xf32>,
    return
  }
  func.func @transform_0(%arg0: i32) -> (i32, i32, i32) {
    %c0_i32 = arith.constant 0 : i32
    %c0_i32_0 = arith.constant 0 : i32
    %c0_i32_1 = arith.constant 0 : i32
    return %arg0, %c0_i32, %c0_i32_0 : i32, i32, i32
  }
  func.func @transform_1(%arg0: i32) -> (i32, i32) {
    %c0_i32 = arith.constant 0 : i32
    %c0_i32_0 = arith.constant 0 : i32
    %c0_i32_1 = arith.constant 0 : i32
    return %c0_i32, %c0_i32_0 : i32, i32
  }
  func.func @transform_2(%arg0: i32) -> (i32, i32) {
    %c0_i32 = arith.constant 0 : i32
    %c0_i32_0 = arith.constant 0 : i32
    return %arg0, %c0_i32 : i32, i32
  }
}

</mosaic_0001>

<llo_original>
// kernel: tpu_custom_call.1
$region0: #{tpu_custom_call.1}
  #allocation0 [shape = 'u32[]', space=smem, size = 0x4, offset = 0x4, fixed_abs, tag = 'smem constant byte address 0x4 - core index']
  #allocation1 [shape = 'u32[144,128]{1,0:T(1,128)}', space=vmem, size = 0x12000, scoped, tag = 'internal scratch']
  %s0 = inlined_call_operand.vmem [shape: f32[2,16,32], index: 0, kind: input, shape index: {}]
  %s1 = inlined_call_operand.vmem [shape: f32[32,8], index: 1, kind: input, shape index: {}]
  %s2 = inlined_call_operand.hbm [shape: f32[2,256], index: 2, kind: output, shape index: {}]
  %s3 = sld [smem:[#allocation0]]
  $region18: #{tpu_custom_call.1} parent=0
    _
  %s5 = ssub.s32 1, %s3
  %s6 = scalar_select 0, %s5, %s3
  $region1: #{tpu_custom_call.1} parent=0
    #allocation2 [shape = 'u8[2048]{0}', space=vmem, size = 0x800, scoped, tag = 'output window, operand 0, single buffered']
    #allocation3 [shape = 's32[1]{0}', space=sflag, size = 0x4, scoped, tag = 'scoped memory for tpu_custom_call.1']
    %7 = vsyncpa [#allocation3], 0
    // Predicated region
    $region2: #{tpu_custom_call.1} parent=1 // pred_check
      _
    $region3: #{tpu_custom_call.1} parent=1 // pred_check_branch
      %9 = sbr.rel (0) target = $region5
    $region4: #{tpu_custom_call.1} parent=1 // pred_region
      _
    $region5: #{tpu_custom_call.1} parent=1 // pred_fallthru
      _
    // Predicated region
    $region6: #{tpu_custom_call.1} parent=1 // pred_check
      _
    $region7: #{tpu_custom_call.1} parent=1 // pred_check_branch
      %11 = sbr.rel (0) target = $region9
    $region8: #{tpu_custom_call.1} parent=1 // pred_region
      _
    $region9: #{tpu_custom_call.1} parent=1 // pred_fallthru
      _
    %v12 = vld [vmem:[%s0] sm:$0xff]
    %v13 = vld [vmem:[%s0 + $0x8] sm:$0xff]
    %v14 = vld [vmem:[%s0 + $0x10] sm:$0xff]
    %v15 = vld [vmem:[%s0 + $0x18] sm:$0xff]
    %v16 = vld [vmem:[%s1] sm:$0xff]
    %v17 = vld [vmem:[%s1 + $0x8] sm:$0xff]
    %v18 = vld [vmem:[%s1 + $0x10] sm:$0xff]
    %v19 = vld [vmem:[%s1 + $0x18] sm:$0xff]
    %vm20 = vcmask 261120
    %v22 = vsel %vm20, %v12, 0
    %v25 = vsel %vm20, %v13, 0
    %v28 = vsel %vm20, %v14, 0
    %v31 = vsel %vm20, %v15, 0
    %33 = vmatprep.subr.mxu0 0.0
    %34 = vmatpush1.msra.mxu0 %v16
    %35 = vmatprep.subr.mxu0 0.0
    %36 = vmatpush1.msra.mxu0 %v17
    %37 = vmatprep.subr.mxu0 0.0
    %38 = vmatpush1.msra.mxu0 %v18
    %39 = vmatprep.subr.mxu0 0.0
    %40 = vmatpush1.msra.mxu0 %v19
    %41 = vmatprep.subr.mxu0 0.0
    %42 = vmatpush1.msra.mxu0 0.0
    %43 = vmatprep.subr.mxu0 0.0
    %44 = vmatpush1.msra.mxu0 0.0
    %45 = vmatprep.subr.mxu0 0.0
    %46 = vmatpush1.msra.mxu0 0.0
    %47 = vmatprep.subr.mxu0 0.0
    %48 = vmatpush1.msra.mxu0 0.0
    %49 = vmatprep.subr.mxu0 0.0
    %50 = vmatpush1.msra.mxu0 0.0
    %51 = vmatprep.subr.mxu0 0.0
    %52 = vmatpush1.msra.mxu0 0.0
    %53 = vmatprep.subr.mxu0 0.0
    %54 = vmatpush1.msra.mxu0 0.0
    %55 = vmatprep.subr.mxu0 0.0
    %56 = vmatpush1.msra.mxu0 0.0
    %57 = vmatprep.subr.mxu0 0.0
    %58 = vmatpush1.msra.mxu0 0.0
    %59 = vmatprep.subr.mxu0 0.0
    %60 = vmatpush1.msra.mxu0 0.0
    %61 = vmatprep.subr.mxu0 0.0
    %62 = vmatpush1.msra.mxu0 0.0
    %63 = vmatprep.subr.mxu0 0.0
    %64 = vmatpush1.msra.mxu0 0.0
    %65 = vmatprep.subr.mxu0 0.0
    %66 = vmatpush1.msra.mxu0 0.0
    %67 = vmatprep.subr.mxu0 0.0
    %68 = vmatpush1.msra.mxu0 0.0
    %69 = vmatprep.subr.mxu0 0.0
    %70 = vmatpush1.msra.mxu0 0.0
    %71 = vmatprep.subr.mxu0 0.0
    %72 = vmatpush1.msra.mxu0 0.0
    %73 = vmatprep.subr.mxu0 0.0
    %74 = vmatpush1.msra.mxu0 0.0
    %75 = vmatprep.subr.mxu0 0.0
    %76 = vmatpush1.msra.mxu0 0.0
    %77 = vmatprep.subr.mxu0 0.0
    %78 = vmatpush1.msra.mxu0 0.0
    %79 = vmatprep.subr.mxu0 0.0
    %80 = vmatpush1.msra.mxu0 0.0
    %81 = vmatprep.subr.mxu0 0.0
    %82 = vmatpush1.msra.mxu0 0.0
    %83 = vmatprep.subr.mxu0 0.0
    %84 = vmatpush1.msra.mxu0 0.0
    %85 = vmatprep.subr.mxu0 0.0
    %86 = vmatpush1.msra.mxu0 0.0
    %87 = vmatprep.subr.mxu0 0.0
    %88 = vmatpush1.msra.mxu0 0.0
    %89 = vmatprep.subr.mxu0 0.0
    %90 = vmatpush1.msra.mxu0 0.0
    %91 = vmatprep.subr.mxu0 0.0
    %92 = vmatpush1.msra.mxu0 0.0
    %93 = vmatprep.subr.mxu0 0.0
    %94 = vmatpush1.msra.mxu0 0.0
    %95 = vmatprep.subr.mxu0 0.0
    %96 = vmatpush1.msra.mxu0 0.0
    %97 = vmatprep.mubr.f32.mxu0 0.0
    %98 = vmatmul.mubr.f32.gmra.mrb[0].mxu0 %v22
    %v99 = vpop.f32.mrb[0].mxu0
    %v100 = vadd.f32 0.0, %v99
    %v101 = vpop.f32.mrb[0].mxu0
    %102 = vmatprep.mubr.f32.mxu0 0.0
    %103 = vmatmul.mubr.f32.gmra.mrb[0].mxu0 %v25
    %v104 = vpop.f32.mrb[0].mxu0
    %v105 = vadd.f32 0.0, %v104
    %v106 = vpop.f32.mrb[0].mxu0
    %107 = vmatprep.mubr.f32.mxu0 0.0
    %108 = vmatmul.mubr.f32.gmra.mrb[0].mxu0 %v28
    %v109 = vpop.f32.mrb[0].mxu0
    %v110 = vadd.f32 0.0, %v109
    %v111 = vpop.f32.mrb[0].mxu0
    %112 = vmatprep.mubr.f32.mxu0 0.0
    %113 = vmatmul.mubr.f32.gmra.mrb[0].mxu0 %v31
    %v114 = vpop.f32.mrb[0].mxu0
    %v115 = vadd.f32 0.0, %v114
    %v116 = vpop.f32.mrb[0].mxu0
    %117 = vdwg.mxu0
    %vm118 = vcmask 64512
    %v119 = vsel %vm118, %v100, -inf
    %v120 = vsel %vm118, %v105, -inf
    %v121 = vmax.f32 %v119, %v120
    %v122 = vrot.slane %v121, 4
    %v123 = vmax.f32 %v121, %v122
    %v124 = vrot.slane %v123, 2
    %v125 = vmax.f32 %v123, %v124
    %v126 = vrot.slane %v125, 1
    %v127 = vmax.f32 %v125, %v126
    %v128 = vsel %vm118, %v110, -inf
    %v129 = vsel %vm118, %v115, -inf
    %v130 = vmax.f32 %v128, %v129
    %v131 = vrot.slane %v130, 4
    %v132 = vmax.f32 %v130, %v131
    %v133 = vrot.slane %v132, 2
    %v134 = vmax.f32 %v132, %v133
    %v135 = vrot.slane %v134, 1
    %v136 = vmax.f32 %v134, %v135
    %v137 = vsub.f32 %v100, %v127
    %v138 = vsub.f32 %v105, %v127
    %v139 = vsub.f32 %v110, %v136
    %v140 = vsub.f32 %v115, %v136
    %v141 = vmul.f32 %v137, 1.442695
    %v142 = vpow.pop %v141
    %v143 = vmul.f32 %v138, 1.442695
    %v144 = vpow.pop %v143
    %v145 = vmul.f32 %v139, 1.442695
    %v146 = vpow.pop %v145
    %v147 = vmul.f32 %v140, 1.442695
    %v148 = vpow.pop %v147
    %v149 = vsel %vm118, %v142, 0.0
    %v150 = vsel %vm118, %v144, 0.0
    %v151 = vadd.f32 %v149, %v150
    %v152 = vrot.slane %v151, 4
    %v153 = vadd.f32 %v151, %v152
    %v154 = vrot.slane %v153, 2
    %v155 = vadd.f32 %v153, %v154
    %v156 = vrot.slane %v155, 1
    %v157 = vadd.f32 %v155, %v156
    %v158 = vsel %vm118, %v146, 0.0
    %v159 = vsel %vm118, %v148, 0.0
    %v160 = vadd.f32 %v158, %v159
    %v161 = vrot.slane %v160, 4
    %v162 = vadd.f32 %v160, %v161
    %v163 = vrot.slane %v162, 2
    %v164 = vadd.f32 %v162, %v163
    %v165 = vrot.slane %v164, 1
    %v166 = vadd.f32 %v164, %v165
    %v167 = vrcp.pop %v157
    %v168 = vrcp.pop %v166
    %v169 = vmul.f32 %v142, %v167
    %v170 = vmul.f32 %v144, %v167
    %v171 = vmul.f32 %v146, %v168
    %v172 = vmul.f32 %v148, %v168
    %173 = vxpose.xlu0.b32.start [1/16] %v169, 128
    %174 = vxpose.xlu0.b32.cont [2/16] %v170, 128
    %175 = vxpose.xlu0.b32.cont [3/16] 0.0, 128
    %176 = vxpose.xlu0.b32.cont [4/16] 0.0, 128
    %177 = vxpose.xlu0.b32.cont [5/16] 0.0, 128
    %178 = vxpose.xlu0.b32.cont [6/16] 0.0, 128
    %179 = vxpose.xlu0.b32.cont [7/16] 0.0, 128
    %180 = vxpose.xlu0.b32.cont [8/16] 0.0, 128
    %181 = vxpose.xlu0.b32.cont [9/16] 0.0, 128
    %182 = vxpose.xlu0.b32.cont [10/16] 0.0, 128
    %183 = vxpose.xlu0.b32.cont [11/16] 0.0, 128
    %184 = vxpose.xlu0.b32.cont [12/16] 0.0, 128
    %185 = vxpose.xlu0.b32.cont [13/16] 0.0, 128
    %186 = vxpose.xlu0.b32.cont [14/16] 0.0, 128
    %187 = vxpose.xlu0.b32.cont [15/16] 0.0, 128
    %188 = vxpose.xlu0.b32.end [16/16] 0.0, 128
    %v189 = vpop.trf.xlu0
    %v190 = vpop.trf.xlu0
    %v191 = vpop.trf.xlu0
    %v192 = vpop.trf.xlu0
    %v193 = vpop.trf.xlu0
    %v194 = vpop.trf.xlu0
    %v195 = vpop.trf.xlu0
    %v196 = vpop.trf.xlu0
    %v197 = vpop.trf.xlu0
    %v198 = vpop.trf.xlu0
    %v199 = vpop.trf.xlu0
    %v200 = vpop.trf.xlu0
    %v201 = vpop.trf.xlu0
    %v202 = vpop.trf.xlu0
    %v203 = vpop.trf.xlu0
    %v204 = vpop.trf.xlu0
    %vm205 = vcmask 130048
    %v207 = vsel %vm205, %v189, 0
    %209 = vmatprep.subr.mxu0 0.0
    %210 = vmatpush1.msra.mxu0 %v12
    %211 = vmatprep.subr.mxu0 0.0
    %212 = vmatpush1.msra.mxu0 %v13
    %213 = vmatprep.subr.mxu0 0.0
    %214 = vmatpush1.msra.mxu0 0.0
    %215 = vmatprep.subr.mxu0 0.0
    %216 = vmatpush1.msra.mxu0 0.0
    %217 = vmatprep.subr.mxu0 0.0
    %218 = vmatpush1.msra.mxu0 0.0
    %219 = vmatprep.subr.mxu0 0.0
    %220 = vmatpush1.msra.mxu0 0.0
    %221 = vmatprep.subr.mxu0 0.0
    %222 = vmatpush1.msra.mxu0 0.0
    %223 = vmatprep.subr.mxu0 0.0
    %224 = vmatpush1.msra.mxu0 0.0
    %225 = vmatprep.subr.mxu0 0.0
    %226 = vmatpush1.msra.mxu0 0.0
    %227 = vmatprep.subr.mxu0 0.0
    %228 = vmatpush1.msra.mxu0 0.0
    %229 = vmatprep.subr.mxu0 0.0
    %230 = vmatpush1.msra.mxu0 0.0
    %231 = vmatprep.subr.mxu0 0.0
    %232 = vmatpush1.msra.mxu0 0.0
    %233 = vmatprep.subr.mxu0 0.0
    %234 = vmatpush1.msra.mxu0 0.0
    %235 = vmatprep.subr.mxu0 0.0
    %236 = vmatpush1.msra.mxu0 0.0
    %237 = vmatprep.subr.mxu0 0.0
    %238 = vmatpush1.msra.mxu0 0.0
    %239 = vmatprep.subr.mxu0 0.0
    %240 = vmatpush1.msra.mxu0 0.0
    %241 = vmatprep.subr.mxu0 0.0
    %242 = vmatpush1.msra.mxu0 0.0
    %243 = vmatprep.subr.mxu0 0.0
    %244 = vmatpush1.msra.mxu0 0.0
    %245 = vmatprep.subr.mxu0 0.0
    %246 = vmatpush1.msra.mxu0 0.0
    %247 = vmatprep.subr.mxu0 0.0
    %248 = vmatpush1.msra.mxu0 0.0
    %249 = vmatprep.subr.mxu0 0.0
    %250 = vmatpush1.msra.mxu0 0.0
    %251 = vmatprep.subr.mxu0 0.0
    %252 = vmatpush1.msra.mxu0 0.0
    %253 = vmatprep.subr.mxu0 0.0
    %254 = vmatpush1.msra.mxu0 0.0
    %255 = vmatprep.subr.mxu0 0.0
    %256 = vmatpush1.msra.mxu0 0.0
    %257 = vmatprep.subr.mxu0 0.0
    %258 = vmatpush1.msra.mxu0 0.0
    %259 = vmatprep.subr.mxu0 0.0
    %260 = vmatpush1.msra.mxu0 0.0
    %261 = vmatprep.subr.mxu0 0.0
    %262 = vmatpush1.msra.mxu0 0.0
    %263 = vmatprep.subr.mxu0 0.0
    %264 = vmatpush1.msra.mxu0 0.0
    %265 = vmatprep.subr.mxu0 0.0
    %266 = vmatpush1.msra.mxu0 0.0
    %267 = vmatprep.subr.mxu0 0.0
    %268 = vmatpush1.msra.mxu0 0.0
    %269 = vmatprep.subr.mxu0 0.0
    %270 = vmatpush1.msra.mxu0 0.0
    %271 = vmatprep.subr.mxu0 0.0
    %272 = vmatpush1.msra.mxu0 0.0
    %273 = vmatprep.mubr.f32.mxu0 0.0
    %274 = vmatmul.mubr.f32.gmra.mrb[0].mxu0 %v207
    %v275 = vpop.f32.mrb[0].mxu0
    %v276 = vadd.f32 0.0, %v275
    %v277 = vpop.f32.mrb[0].mxu0
    %278 = vdwg.mxu0
    %279 = vxpose.xlu0.b32.start [1/16] %v171, 128
    %280 = vxpose.xlu0.b32.cont [2/16] %v172, 128
    %281 = vxpose.xlu0.b32.cont [3/16] 0.0, 128
    %282 = vxpose.xlu0.b32.cont [4/16] 0.0, 128
    %283 = vxpose.xlu0.b32.cont [5/16] 0.0, 128
    %284 = vxpose.xlu0.b32.cont [6/16] 0.0, 128
    %285 = vxpose.xlu0.b32.cont [7/16] 0.0, 128
    %286 = vxpose.xlu0.b32.cont [8/16] 0.0, 128
    %287 = vxpose.xlu0.b32.cont [9/16] 0.0, 128
    %288 = vxpose.xlu0.b32.cont [10/16] 0.0, 128
    %289 = vxpose.xlu0.b32.cont [11/16] 0.0, 128
    %290 = vxpose.xlu0.b32.cont [12/16] 0.0, 128
    %291 = vxpose.xlu0.b32.cont [13/16] 0.0, 128
    %292 = vxpose.xlu0.b32.cont [14/16] 0.0, 128
    %293 = vxpose.xlu0.b32.cont [15/16] 0.0, 128
    %294 = vxpose.xlu0.b32.end [16/16] 0.0, 128
    %v295 = vpop.trf.xlu0
    %v296 = vpop.trf.xlu0
    %v297 = vpop.trf.xlu0
    %v298 = vpop.trf.xlu0
    %v299 = vpop.trf.xlu0
    %v300 = vpop.trf.xlu0
    %v301 = vpop.trf.xlu0
    %v302 = vpop.trf.xlu0
    %v303 = vpop.trf.xlu0
    %v304 = vpop.trf.xlu0
    %v305 = vpop.trf.xlu0
    %v306 = vpop.trf.xlu0
    %v307 = vpop.trf.xlu0
    %v308 = vpop.trf.xlu0
    %v309 = vpop.trf.xlu0
    %v310 = vpop.trf.xlu0
    %v312 = vsel %vm205, %v295, 0
    %314 = vmatprep.subr.mxu0 0.0
    %315 = vmatpush1.msra.mxu0 %v14
    %316 = vmatprep.subr.mxu0 0.0
    %317 = vmatpush1.msra.mxu0 %v15
    %318 = vmatprep.subr.mxu0 0.0
    %319 = vmatpush1.msra.mxu0 0.0
    %320 = vmatprep.subr.mxu0 0.0
    %321 = vmatpush1.msra.mxu0 0.0
    %322 = vmatprep.subr.mxu0 0.0
    %323 = vmatpush1.msra.mxu0 0.0
    %324 = vmatprep.subr.mxu0 0.0
    %325 = vmatpush1.msra.mxu0 0.0
    %326 = vmatprep.subr.mxu0 0.0
    %327 = vmatpush1.msra.mxu0 0.0
    %328 = vmatprep.subr.mxu0 0.0
    %329 = vmatpush1.msra.mxu0 0.0
    %330 = vmatprep.subr.mxu0 0.0
    %331 = vmatpush1.msra.mxu0 0.0
    %332 = vmatprep.subr.mxu0 0.0
    %333 = vmatpush1.msra.mxu0 0.0
    %334 = vmatprep.subr.mxu0 0.0
    %335 = vmatpush1.msra.mxu0 0.0
    %336 = vmatprep.subr.mxu0 0.0
    %337 = vmatpush1.msra.mxu0 0.0
    %338 = vmatprep.subr.mxu0 0.0
    %339 = vmatpush1.msra.mxu0 0.0
    %340 = vmatprep.subr.mxu0 0.0
    %341 = vmatpush1.msra.mxu0 0.0
    %342 = vmatprep.subr.mxu0 0.0
    %343 = vmatpush1.msra.mxu0 0.0
    %344 = vmatprep.subr.mxu0 0.0
    %345 = vmatpush1.msra.mxu0 0.0
    %346 = vmatprep.subr.mxu0 0.0
    %347 = vmatpush1.msra.mxu0 0.0
    %348 = vmatprep.subr.mxu0 0.0
    %349 = vmatpush1.msra.mxu0 0.0
    %350 = vmatprep.subr.mxu0 0.0
    %351 = vmatpush1.msra.mxu0 0.0
    %352 = vmatprep.subr.mxu0 0.0
    %353 = vmatpush1.msra.mxu0 0.0
    %354 = vmatprep.subr.mxu0 0.0
    %355 = vmatpush1.msra.mxu0 0.0
    %356 = vmatprep.subr.mxu0 0.0
    %357 = vmatpush1.msra.mxu0 0.0
    %358 = vmatprep.subr.mxu0 0.0
    %359 = vmatpush1.msra.mxu0 0.0
    %360 = vmatprep.subr.mxu0 0.0
    %361 = vmatpush1.msra.mxu0 0.0
    %362 = vmatprep.subr.mxu0 0.0
    %363 = vmatpush1.msra.mxu0 0.0
    %364 = vmatprep.subr.mxu0 0.0
    %365 = vmatpush1.msra.mxu0 0.0
    %366 = vmatprep.subr.mxu0 0.0
    %367 = vmatpush1.msra.mxu0 0.0
    %368 = vmatprep.subr.mxu0 0.0
    %369 = vmatpush1.msra.mxu0 0.0
    %370 = vmatprep.subr.mxu0 0.0
    %371 = vmatpush1.msra.mxu0 0.0
    %372 = vmatprep.subr.mxu0 0.0
    %373 = vmatpush1.msra.mxu0 0.0
    %374 = vmatprep.subr.mxu0 0.0
    %375 = vmatpush1.msra.mxu0 0.0
    %376 = vmatprep.subr.mxu0 0.0
    %377 = vmatpush1.msra.mxu0 0.0
    %378 = vmatprep.mubr.f32.mxu0 0.0
    %379 = vmatmul.mubr.f32.gmra.mrb[0].mxu0 %v312
    %v380 = vpop.f32.mrb[0].mxu0
    %v381 = vadd.f32 0.0, %v380
    %v382 = vpop.f32.mrb[0].mxu0
    %383 = vdwg.mxu0
    %v384 = vcombine.high %v276, 0.0
    %v386 = vunpack.c.l.s4 1983009808
    %v387 = vunpack.c.0.s8 %v386
    %v388 = vlaneseq
    %v389 = vshrl.u32 %v388, 7
    %v390 = vsub.s32 %v387, %v389
    %v391 = vrot.slane %v276, %v390
    %v393 = vunpack.c.l.s4 1983009808
    %v394 = vunpack.c.0.s8 %v393
    %v395 = vlaneseq
    %v396 = vshrl.u32 %v395, 7
    %v397 = vsub.s32 %v394, %v396
    %v398 = vrot.slane %v384, %v397
    %v399 = vcombine.high %v381, 0.0
    %v401 = vunpack.c.l.s4 1983009808
    %v402 = vunpack.c.0.s8 %v401
    %v403 = vlaneseq
    %v404 = vshrl.u32 %v403, 7
    %v405 = vsub.s32 %v402, %v404
    %v406 = vrot.slane %v381, %v405
    %v408 = vunpack.c.l.s4 1983009808
    %v409 = vunpack.c.0.s8 %v408
    %v410 = vlaneseq
    %v411 = vshrl.u32 %v410, 7
    %v412 = vsub.s32 %v409, %v411
    %v413 = vrot.slane %v399, %v412
    %v414 = vcombine.low %v391, %v406
    %v415 = vcombine.high %v391, %v406
    %v417 = vunpack.c.l.s4 1934713408
    %v418 = vunpack.c.0.s8 %v417
    %v419 = vlaneseq
    %v420 = vshrl.u32 %v419, 7
    %v421 = vsub.s32 %v418, %v420
    %v422 = vrot.slane %v414, %v421
    %v424 = vunpack.c.l.s4 1934713408
    %v425 = vunpack.c.0.s8 %v424
    %v426 = vlaneseq
    %v427 = vshrl.u32 %v426, 7
    %v428 = vsub.s32 %v425, %v427
    %v429 = vrot.slane %v415, %v428
    %v430 = vcombine.low %v398, %v413
    %v431 = vcombine.high %v398, %v413
    %v433 = vunpack.c.l.s4 1934713408
    %v434 = vunpack.c.0.s8 %v433
    %v435 = vlaneseq
    %v436 = vshrl.u32 %v435, 7
    %v437 = vsub.s32 %v434, %v436
    %v438 = vrot.slane %v430, %v437
    %v440 = vunpack.c.l.s4 1934713408
    %v441 = vunpack.c.0.s8 %v440
    %v442 = vlaneseq
    %v443 = vshrl.u32 %v442, 7
    %v444 = vsub.s32 %v441, %v443
    %v445 = vrot.slane %v431, %v444
    %v446 = vcombine.high %v422, 0.0
    %v447 = vcombine.high %v429, 0.0
    %v448 = vcombine.high %v438, 0.0
    %v449 = vcombine.high %v445, 0.0
    %451 = vrot.lane.b32.xlu0 %v446, 32
    %v452 = vpop.permute.xlu0 %451
    %455 = vrot.lane.b32.xlu0 %v429, 64
    %v456 = vpop.permute.xlu0 %455
    %459 = vrot.lane.b32.xlu0 %v447, 96
    %v460 = vpop.permute.xlu0 %459
    %463 = vrot.lane.b32.xlu0 %v448, 32
    %v464 = vpop.permute.xlu0 %463
    %467 = vrot.lane.b32.xlu0 %v445, 64
    %v468 = vpop.permute.xlu0 %467
    %471 = vrot.lane.b32.xlu0 %v449, 96
    %v472 = vpop.permute.xlu0 %471
    %v474 = vsel %vm20, %v422, %v452
    %vm475 = vcmask 523264
    %v476 = vsel %vm475, %v474, %v456
    %vm477 = vcmask 785408
    %v478 = vsel %vm477, %v476, %v460
    %v479 = vsel %vm20, %v438, %v464
    %v480 = vsel %vm475, %v479, %v468
    %v481 = vsel %vm477, %v480, %v472
    %v484 = vcombine.low %v478, %v481
    %v486 = vunpack.c.l.s4 1983009808
    %v487 = vunpack.c.0.s8 %v486
    %v488 = vlaneseq
    %v489 = vshrl.u32 %v488, 7
    %v490 = vsub.s32 %v487, %v489
    %v491 = vrot.slane %v484, %v490
    %493 = vst [vmem:[#allocation2] sm:$0xf] %v491
    // Predicated region
    $region10: #{tpu_custom_call.1} parent=1 // pred_check
      _
    $region11: #{tpu_custom_call.1} parent=1 // pred_check_branch
      %495 = sbr.rel (0) target = $region13
    $region12: #{tpu_custom_call.1} parent=1 // pred_region
      %s497 = ssub.s32 64, 64
      %498 = vsyncadd [#allocation3], %s497
      %s500 = sshll.u32 [#allocation2], 4
      %s501 = int_to_ptr.vmem [resolvable:$true] %s500
      %503 = dma.vmem_to_hbm [thread:$0]  %s501, 64, %s2, [#allocation3]
    $region13: #{tpu_custom_call.1} parent=1 // pred_fallthru
      _
    // Predicated region
    $region14: #{tpu_custom_call.1} parent=1 // pred_check
      _
    $region15: #{tpu_custom_call.1} parent=1 // pred_check_branch
      %505 = sbr.rel (0) target = $region17
    $region16: #{tpu_custom_call.1} parent=1 // pred_region
      %506 = dma.done [#allocation3], 64
    $region17: #{tpu_custom_call.1} parent=1 // pred_fallthru
      _
    %507 = vsyncpa [#allocation3], 1

</llo_original>
